<compile_context>
chip_gen: v6e
topology: v6e:2x2x1
jax: 0.10.0
libtpu: 0.0.40
codegen_flags: <defaults>
</compile_context>

<pallas_src>
import numpy as np

import jax
import jax.numpy as jnp
from jax import lax
from jax.experimental import pallas as pl
from jax.experimental.pallas import tpu as pltpu

EPS = 1e-5          # PyTorch BatchNorm2d default eps
NEG_SLOPE = 0.2     # LeakyReLU slope


# ---------------------------------------------------------------------------
# Fused Pallas kernel: layers 1-5
# ---------------------------------------------------------------------------
def _discriminator_kernel(x1_ref,
                          w1_ref, g1_ref, b1_ref,
                          w2_ref, g2_ref, b2_ref,
                          w3_ref, g3_ref, b3_ref,
                          w4_ref, g4_ref, b4_ref,
                          w5_ref, seg_ref,
                          o_ref):
    # x1_ref : (Cin, M1)    columns = all layer-1 positions; first M2 columns are the
    #                       positions that survive layer-2's stride-2, in (n,h2,w2) order.
    # wK_ref : (Cout, Cin)  gK/bK : (Cout, 1)
    # w5_ref : (C4, M2)     per-column 7x7 conv weight (already aligned to columns)
    # seg_ref: (M2, Mout)   0/1 column->output-patch indicator
    # o_ref  : (1, Mout)

    def conv_bn_lrelu(x, w_ref, g_ref, b_ref):
        y = jnp.dot(w_ref[...], x, preferred_element_type=jnp.float32)   # (Cout, M)
        m = y.shape[1]
        inv_m = 1.0 / float(m)
        # single-pass batch stats over the lane (position) axis
        s1 = jnp.sum(y, axis=1, keepdims=True)
        s2 = jnp.sum(y * y, axis=1, keepdims=True)
        mean = s1 * inv_m
        var = s2 * inv_m - mean * mean                  # biased variance (train-mode BN)
        scale = g_ref[...] * lax.rsqrt(var + EPS)
        shift = b_ref[...] - mean * scale
        z = y * scale + shift
        return jnp.maximum(z, NEG_SLOPE * z)            # LeakyReLU(0.2)

    m2 = seg_ref.shape[0]

    x1 = x1_ref[...]                                           # (Cin, M1)
    a1 = conv_bn_lrelu(x1, w1_ref, g1_ref, b1_ref)             # (ndf , M1)
    # layer2 stride-2 == take the contiguous prefix of surviving columns
    a2 = conv_bn_lrelu(a1[:, :m2], w2_ref, g2_ref, b2_ref)     # (2ndf, M2)
    a3 = conv_bn_lrelu(a2, w3_ref, g3_ref, b3_ref)             # (4ndf, M2)
    a4 = conv_bn_lrelu(a3, w4_ref, g4_ref, b4_ref)             # (8ndf, M2)

    # layer5: 7x7 / stride-7 conv (Cout=1) + Sigmoid, done lane-dense:
    #   per-column channel reduction (VPU mul + sublane reduce), then a tiny
    #   segment matmul that sums the 49 columns of each output patch.
    col = jnp.sum(a4 * w5_ref[...], axis=0, keepdims=True)     # (1, M2)
    logits = jnp.dot(col, seg_ref[...], preferred_element_type=jnp.float32)  # (1, Mout)
    o_ref[...] = 1.0 / (1.0 + jnp.exp(-logits))


# ---------------------------------------------------------------------------
# Parameter construction (PyTorch-equivalent shapes)
# ---------------------------------------------------------------------------
def init_params(ndf, key):
    ks = jax.random.split(key, 5)
    chans = [(3, ndf), (ndf, 2 * ndf), (2 * ndf, 4 * ndf), (4 * ndf, 8 * ndf)]
    params = {}
    for idx, (cin, cout) in enumerate(chans, start=1):
        w = 0.05 * jax.random.normal(ks[idx - 1], (cout, cin, 1, 1), jnp.float32)
        params[f"w{idx}"] = w
        params[f"gamma{idx}"] = jnp.ones((cout,), jnp.float32)
        params[f"beta{idx}"] = jnp.zeros((cout,), jnp.float32)
    params["w5"] = 0.05 * jax.random.normal(ks[4], (1, 8 * ndf, 7, 7), jnp.float32)
    return params


# ---------------------------------------------------------------------------
# Forward pass (static host-side index/layout prep, hot path in one Pallas call)
# ---------------------------------------------------------------------------
def discriminator_forward(x_nchw, params):
    N, Cin, H, W = x_nchw.shape
    ndf = params["w1"].shape[0]
    C4 = 8 * ndf

    # layer1 stride-2 with a 1x1 kernel == spatial subsampling of the (3-channel) input
    xs = x_nchw[:, :, ::2, ::2]                                # (N, Cin, H1, W1)
    H1, W1 = xs.shape[2], xs.shape[3]
    S1 = H1 * W1

    # Column permutation: positions surviving layer-2's stride-2 first, (n, h2, w2) order.
    surv_sp = (np.arange(0, H1, 2)[:, None] * W1 +
               np.arange(0, W1, 2)[None, :]).reshape(-1)        # (S2,)
    rest_sp = np.setdiff1d(np.arange(S1), surv_sp, assume_unique=True)
    H2 = (H1 - 1) // 2 + 1
    W2 = (W1 - 1) // 2 + 1
    S2 = H2 * W2
    M1 = N * S1
    M2 = N * S2

    xs_flat = xs.reshape(N, Cin, S1)
    x_surv = jnp.transpose(jnp.take(xs_flat, jnp.asarray(surv_sp), axis=2),
                           (1, 0, 2)).reshape(Cin, M2)
    x_rest = jnp.transpose(jnp.take(xs_flat, jnp.asarray(rest_sp), axis=2),
                           (1, 0, 2)).reshape(Cin, M1 - M2)
    x1 = jnp.concatenate([x_surv, x_rest], axis=1).astype(jnp.float32)   # (Cin, M1)

    # Layer-5 (7x7, stride 7, no padding) static prep: per-column weight + segment matrix.
    Ho = (H2 - 7) // 7 + 1
    Wo = (W2 - 7) // 7 + 1
    Mout = N * Ho * Wo

    h2g, w2g = np.meshgrid(np.arange(H2), np.arange(W2), indexing="ij")
    valid_sp = ((h2g < Ho * 7) & (w2g < Wo * 7)).reshape(-1)            # (S2,)
    kidx_sp = ((h2g % 7) * 7 + (w2g % 7)).reshape(-1)                   # (S2,)
    oidx_sp = ((h2g // 7) * Wo + (w2g // 7)).reshape(-1)                # (S2,)

    valid = np.tile(valid_sp, N)                                        # (M2,)
    kidx = np.tile(kidx_sp, N)
    out_of_col = np.repeat(np.arange(N), S2) * (Ho * Wo) + np.tile(oidx_sp, N)

    w5flat = params["w5"].reshape(C4, 49)                               # (C4, 49)
    w5full = (jnp.take(w5flat, jnp.asarray(kidx), axis=1) *
              jnp.asarray(valid.astype(np.float32))[None, :])           # (C4, M2)

    seg_np = np.zeros((M2, Mout), np.float32)
    cols = np.arange(M2)
    seg_np[cols[valid], out_of_col[valid]] = 1.0
    seg = jnp.asarray(seg_np)                                           # (M2, Mout)

    # Kernel arguments: channel-major weights / column-shaped BN affine params.
    def wmat(i):
        w = params[f"w{i}"]
        return w.reshape(w.shape[0], -1)                                # (Cout, Cin)

    def gcol(i):
        return params[f"gamma{i}"].reshape(-1, 1)

    def bcol(i):
        return params[f"beta{i}"].reshape(-1, 1)

    args = [x1]
    for i in range(1, 5):
        args += [wmat(i), gcol(i), bcol(i)]
    args += [w5full, seg]

    vmem_spec = pl.BlockSpec(memory_space=pltpu.MemorySpace.VMEM)
    out2d = pl.pallas_call(
        _discriminator_kernel,
        out_shape=jax.ShapeDtypeStruct((1, Mout), jnp.float32),
        in_specs=[vmem_spec] * len(args),
        out_specs=vmem_spec,
    )(*args)

    return out2d.reshape(N, Ho, Wo)[:, None, :, :]                      # NCHW (N,1,Ho,Wo)


# ---------------------------------------------------------------------------
# Pure-JAX reference (training-mode BN, exact PyTorch semantics) for validation
# ---------------------------------------------------------------------------
def reference_forward(x_nchw, params):
    dn = ("NCHW", "OIHW", "NCHW")

    def bn_lrelu(y, gamma, beta):
        mean = y.mean(axis=(0, 2, 3), keepdims=True)
        var = ((y - mean) ** 2).mean(axis=(0, 2, 3), keepdims=True)
        z = (y - mean) / jnp.sqrt(var + EPS)
        z = z * gamma.reshape(1, -1, 1, 1) + beta.reshape(1, -1, 1, 1)
        return jnp.where(z >= 0, z, NEG_SLOPE * z)

    out = x_nchw
    strides = [2, 2, 1, 1]
    for idx, s in enumerate(strides, start=1):
        out = lax.conv_general_dilated(out, params[f"w{idx}"], (s, s), "VALID",
                                       dimension_numbers=dn)
        out = bn_lrelu(out, params[f"gamma{idx}"], params[f"beta{idx}"])
    out = lax.conv_general_dilated(out, params["w5"], (7, 7), "VALID",
                                   dimension_numbers=dn)
    return 1.0 / (1.0 + jnp.exp(-out))


# ---------------------------------------------------------------------------
if __name__ == "__main__":
    ndf = 8
    key = jax.random.PRNGKey(0)
    kx, kp = jax.random.split(key)

    # 28x28 input: 28 -> 14 (layer1, s=2) -> 7 (layer2, s=2) -> 7 -> 7 -> 1x1 (layer5)
    x = jax.random.normal(kx, (2, 3, 28, 28), jnp.float32)
    params = init_params(ndf, kp)

    fwd = jax.jit(discriminator_forward)
    out = jax.block_until_ready(fwd(x, params))

    ref = jax.block_until_ready(reference_forward(x, params))
    assert out.shape == ref.shape == (2, 1, 1, 1), (out.shape, ref.shape)
    assert jnp.allclose(out, ref, atol=1e-3, rtol=1e-3), (
        f"mismatch: max abs diff {jnp.max(jnp.abs(out - ref))}")

    print("KERNEL_OK")
</pallas_src>

<mosaic_0001>
module attributes {stable_mosaic.version = 11 : i64} {
  func.func @_discriminator_kernel(%arg0: memref<3x392xf32, #tpu.memory_space<vmem>>, %arg1: memref<8x3xf32, #tpu.memory_space<vmem>>, %arg2: memref<8x1xf32, #tpu.memory_space<vmem>>, %arg3: memref<8x1xf32, #tpu.memory_space<vmem>>, %arg4: memref<16x8xf32, #tpu.memory_space<vmem>>, %arg5: memref<16x1xf32, #tpu.memory_space<vmem>>, %arg6: memref<16x1xf32, #tpu.memory_space<vmem>>, %arg7: memref<32x16xf32, #tpu.memory_space<vmem>>, %arg8: memref<32x1xf32, #tpu.memory_space<vmem>>, %arg9: memref<32x1xf32, #tpu.memory_space<vmem>>, %arg10: memref<64x32xf32, #tpu.memory_space<vmem>>, %arg11: memref<64x1xf32, #tpu.memory_space<vmem>>, %arg12: memref<64x1xf32, #tpu.memory_space<vmem>>, %arg13: memref<64x98xf32, #tpu.memory_space<vmem>>, %arg14: memref<98x2xf32, #tpu.memory_space<vmem>>, %arg15: memref<1x2xf32, #tpu.memory_space<vmem>>) attributes {dimension_semantics = [], scalar_prefetch = 0 : i64, scratch_operands = 0 : i64, tpu.core_type = #tpu.core_type<tc>} {
    %c0 = arith.constant 0 : index
    %c0_0 = arith.constant 0 : index
    %0 = vector.load %arg0[%c0, %c0_0] : memref<3x392xf32, #tpu.memory_space<vmem>>, vector<3x392xf32>
    %c0_1 = arith.constant 0 : index
    %c0_2 = arith.constant 0 : index
    %1 = vector.load %arg1[%c0_1, %c0_2] : memref<8x3xf32, #tpu.memory_space<vmem>>, vector<8x3xf32>
    %cst = arith.constant dense<0.000000e+00> : vector<8x392xf32>
    %2 = tpu.matmul %1, %0, %cst {dimension_numbers = #tpu.dot_dimension_numbers<[1], [0], [0], [1], [0, 0, 1, 1], [], []>} : vector<8x3xf32>, vector<3x392xf32>, vector<8x392xf32> -> vector<8x392xf32>
    %cst_3 = arith.constant dense<0.000000e+00> : vector<8xf32>
    %3 = vector.multi_reduction <add>, %2, %cst_3 [1] : vector<8x392xf32> to vector<8xf32>
    %4 = vector.shape_cast %3 : vector<8xf32> to vector<8x1xf32>
    %5 = arith.mulf %2, %2 : vector<8x392xf32>
    %cst_4 = arith.constant dense<0.000000e+00> : vector<8xf32>
    %6 = vector.multi_reduction <add>, %5, %cst_4 [1] : vector<8x392xf32> to vector<8xf32>
    %7 = vector.shape_cast %6 : vector<8xf32> to vector<8x1xf32>
    %cst_5 = arith.constant 0.00255102036 : f32
    %8 = vector.broadcast %cst_5 : f32 to vector<8x1xf32>
    %9 = arith.mulf %4, %8 : vector<8x1xf32>
    %cst_6 = arith.constant 0.00255102036 : f32
    %10 = vector.broadcast %cst_6 : f32 to vector<8x1xf32>
    %11 = arith.mulf %7, %10 : vector<8x1xf32>
    %12 = arith.mulf %9, %9 : vector<8x1xf32>
    %13 = arith.subf %11, %12 : vector<8x1xf32>
    %c0_7 = arith.constant 0 : index
    %c0_8 = arith.constant 0 : index
    %14 = vector.load %arg2[%c0_7, %c0_8] : memref<8x1xf32, #tpu.memory_space<vmem>>, vector<8x1xf32>
    %cst_9 = arith.constant 9.99999974E-6 : f32
    %15 = vector.broadcast %cst_9 : f32 to vector<8x1xf32>
    %16 = arith.addf %13, %15 : vector<8x1xf32>
    %17 = math.rsqrt %16 : vector<8x1xf32>
    %18 = arith.mulf %14, %17 : vector<8x1xf32>
    %c0_10 = arith.constant 0 : index
    %c0_11 = arith.constant 0 : index
    %19 = vector.load %arg3[%c0_10, %c0_11] : memref<8x1xf32, #tpu.memory_space<vmem>>, vector<8x1xf32>
    %20 = arith.mulf %9, %18 : vector<8x1xf32>
    %21 = arith.subf %19, %20 : vector<8x1xf32>
    %22 = vector.broadcast %18 : vector<8x1xf32> to vector<8x392xf32>
    %23 = arith.mulf %2, %22 : vector<8x392xf32>
    %24 = vector.broadcast %21 : vector<8x1xf32> to vector<8x392xf32>
    %25 = arith.addf %23, %24 : vector<8x392xf32>
    %cst_12 = arith.constant 2.000000e-01 : f32
    %26 = vector.broadcast %cst_12 : f32 to vector<8x392xf32>
    %27 = arith.mulf %26, %25 : vector<8x392xf32>
    %28 = arith.maximumf %25, %27 : vector<8x392xf32>
    %29 = vector.extract_strided_slice %28 {offsets = [0, 0], sizes = [8, 98], strides = [1, 1]} : vector<8x392xf32> to vector<8x98xf32>
    %c0_13 = arith.constant 0 : index
    %c0_14 = arith.constant 0 : index
    %30 = vector.load %arg4[%c0_13, %c0_14] : memref<16x8xf32, #tpu.memory_space<vmem>>, vector<16x8xf32>
    %cst_15 = arith.constant dense<0.000000e+00> : vector<16x98xf32>
    %31 = tpu.matmul %30, %29, %cst_15 {dimension_numbers = #tpu.dot_dimension_numbers<[1], [0], [0], [1], [0, 0, 1, 1], [], []>} : vector<16x8xf32>, vector<8x98xf32>, vector<16x98xf32> -> vector<16x98xf32>
    %cst_16 = arith.constant dense<0.000000e+00> : vector<16xf32>
    %32 = vector.multi_reduction <add>, %31, %cst_16 [1] : vector<16x98xf32> to vector<16xf32>
    %33 = vector.shape_cast %32 : vector<16xf32> to vector<16x1xf32>
    %34 = arith.mulf %31, %31 : vector<16x98xf32>
    %cst_17 = arith.constant dense<0.000000e+00> : vector<16xf32>
    %35 = vector.multi_reduction <add>, %34, %cst_17 [1] : vector<16x98xf32> to vector<16xf32>
    %36 = vector.shape_cast %35 : vector<16xf32> to vector<16x1xf32>
    %cst_18 = arith.constant 0.0102040814 : f32
    %37 = vector.broadcast %cst_18 : f32 to vector<16x1xf32>
    %38 = arith.mulf %33, %37 : vector<16x1xf32>
    %cst_19 = arith.constant 0.0102040814 : f32
    %39 = vector.broadcast %cst_19 : f32 to vector<16x1xf32>
    %40 = arith.mulf %36, %39 : vector<16x1xf32>
    %41 = arith.mulf %38, %38 : vector<16x1xf32>
    %42 = arith.subf %40, %41 : vector<16x1xf32>
    %c0_20 = arith.constant 0 : index
    %c0_21 = arith.constant 0 : index
    %43 = vector.load %arg5[%c0_20, %c0_21] : memref<16x1xf32, #tpu.memory_space<vmem>>, vector<16x1xf32>
    %cst_22 = arith.constant 9.99999974E-6 : f32
    %44 = vector.broadcast %cst_22 : f32 to vector<16x1xf32>
    %45 = arith.addf %42, %44 : vector<16x1xf32>
    %46 = math.rsqrt %45 : vector<16x1xf32>
    %47 = arith.mulf %43, %46 : vector<16x1xf32>
    %c0_23 = arith.constant 0 : index
    %c0_24 = arith.constant 0 : index
    %48 = vector.load %arg6[%c0_23, %c0_24] : memref<16x1xf32, #tpu.memory_space<vmem>>, vector<16x1xf32>
    %49 = arith.mulf %38, %47 : vector<16x1xf32>
    %50 = arith.subf %48, %49 : vector<16x1xf32>
    %51 = vector.broadcast %47 : vector<16x1xf32> to vector<16x98xf32>
    %52 = arith.mulf %31, %51 : vector<16x98xf32>
    %53 = vector.broadcast %50 : vector<16x1xf32> to vector<16x98xf32>
    %54 = arith.addf %52, %53 : vector<16x98xf32>
    %cst_25 = arith.constant 2.000000e-01 : f32
    %55 = vector.broadcast %cst_25 : f32 to vector<16x98xf32>
    %56 = arith.mulf %55, %54 : vector<16x98xf32>
    %57 = arith.maximumf %54, %56 : vector<16x98xf32>
    %c0_26 = arith.constant 0 : index
    %c0_27 = arith.constant 0 : index
    %58 = vector.load %arg7[%c0_26, %c0_27] : memref<32x16xf32, #tpu.memory_space<vmem>>, vector<32x16xf32>
    %cst_28 = arith.constant dense<0.000000e+00> : vector<32x98xf32>
    %59 = tpu.matmul %58, %57, %cst_28 {dimension_numbers = #tpu.dot_dimension_numbers<[1], [0], [0], [1], [0, 0, 1, 1], [], []>} : vector<32x16xf32>, vector<16x98xf32>, vector<32x98xf32> -> vector<32x98xf32>
    %cst_29 = arith.constant dense<0.000000e+00> : vector<32xf32>
    %60 = vector.multi_reduction <add>, %59, %cst_29 [1] : vector<32x98xf32> to vector<32xf32>
    %61 = vector.shape_cast %60 : vector<32xf32> to vector<32x1xf32>
    %62 = arith.mulf %59, %59 : vector<32x98xf32>
    %cst_30 = arith.constant dense<0.000000e+00> : vector<32xf32>
    %63 = vector.multi_reduction <add>, %62, %cst_30 [1] : vector<32x98xf32> to vector<32xf32>
    %64 = vector.shape_cast %63 : vector<32xf32> to vector<32x1xf32>
    %cst_31 = arith.constant 0.0102040814 : f32
    %65 = vector.broadcast %cst_31 : f32 to vector<32x1xf32>
    %66 = arith.mulf %61, %65 : vector<32x1xf32>
    %cst_32 = arith.constant 0.0102040814 : f32
    %67 = vector.broadcast %cst_32 : f32 to vector<32x1xf32>
    %68 = arith.mulf %64, %67 : vector<32x1xf32>
    %69 = arith.mulf %66, %66 : vector<32x1xf32>
    %70 = arith.subf %68, %69 : vector<32x1xf32>
    %c0_33 = arith.constant 0 : index
    %c0_34 = arith.constant 0 : index
    %71 = vector.load %arg8[%c0_33, %c0_34] : memref<32x1xf32, #tpu.memory_space<vmem>>, vector<32x1xf32>
    %cst_35 = arith.constant 9.99999974E-6 : f32
    %72 = vector.broadcast %cst_35 : f32 to vector<32x1xf32>
    %73 = arith.addf %70, %72 : vector<32x1xf32>
    %74 = math.rsqrt %73 : vector<32x1xf32>
    %75 = arith.mulf %71, %74 : vector<32x1xf32>
    %c0_36 = arith.constant 0 : index
    %c0_37 = arith.constant 0 : index
    %76 = vector.load %arg9[%c0_36, %c0_37] : memref<32x1xf32, #tpu.memory_space<vmem>>, vector<32x1xf32>
    %77 = arith.mulf %66, %75 : vector<32x1xf32>
    %78 = arith.subf %76, %77 : vector<32x1xf32>
    %79 = vector.broadcast %75 : vector<32x1xf32> to vector<32x98xf32>
    %80 = arith.mulf %59, %79 : vector<32x98xf32>
    %81 = vector.broadcast %78 : vector<32x1xf32> to vector<32x98xf32>
    %82 = arith.addf %80, %81 : vector<32x98xf32>
    %cst_38 = arith.constant 2.000000e-01 : f32
    %83 = vector.broadcast %cst_38 : f32 to vector<32x98xf32>
    %84 = arith.mulf %83, %82 : vector<32x98xf32>
    %85 = arith.maximumf %82, %84 : vector<32x98xf32>
    %c0_39 = arith.constant 0 : index
    %c0_40 = arith.constant 0 : index
    %86 = vector.load %arg10[%c0_39, %c0_40] : memref<64x32xf32, #tpu.memory_space<vmem>>, vector<64x32xf32>
    %cst_41 = arith.constant dense<0.000000e+00> : vector<64x98xf32>
    %87 = tpu.matmul %86, %85, %cst_41 {dimension_numbers = #tpu.dot_dimension_numbers<[1], [0], [0], [1], [0, 0, 1, 1], [], []>} : vector<64x32xf32>, vector<32x98xf32>, vector<64x98xf32> -> vector<64x98xf32>
    %cst_42 = arith.constant dense<0.000000e+00> : vector<64xf32>
    %88 = vector.multi_reduction <add>, %87, %cst_42 [1] : vector<64x98xf32> to vector<64xf32>
    %89 = vector.shape_cast %88 : vector<64xf32> to vector<64x1xf32>
    %90 = arith.mulf %87, %87 : vector<64x98xf32>
    %cst_43 = arith.constant dense<0.000000e+00> : vector<64xf32>
    %91 = vector.multi_reduction <add>, %90, %cst_43 [1] : vector<64x98xf32> to vector<64xf32>
    %92 = vector.shape_cast %91 : vector<64xf32> to vector<64x1xf32>
    %cst_44 = arith.constant 0.0102040814 : f32
    %93 = vector.broadcast %cst_44 : f32 to vector<64x1xf32>
    %94 = arith.mulf %89, %93 : vector<64x1xf32>
    %cst_45 = arith.constant 0.0102040814 : f32
    %95 = vector.broadcast %cst_45 : f32 to vector<64x1xf32>
    %96 = arith.mulf %92, %95 : vector<64x1xf32>
    %97 = arith.mulf %94, %94 : vector<64x1xf32>
    %98 = arith.subf %96, %97 : vector<64x1xf32>
    %c0_46 = arith.constant 0 : index
    %c0_47 = arith.constant 0 : index
    %99 = vector.load %arg11[%c0_46, %c0_47] : memref<64x1xf32, #tpu.memory_space<vmem>>, vector<64x1xf32>
    %cst_48 = arith.constant 9.99999974E-6 : f32
    %100 = vector.broadcast %cst_48 : f32 to vector<64x1xf32>
    %101 = arith.addf %98, %100 : vector<64x1xf32>
    %102 = math.rsqrt %101 : vector<64x1xf32>
    %103 = arith.mulf %99, %102 : vector<64x1xf32>
    %c0_49 = arith.constant 0 : index
    %c0_50 = arith.constant 0 : index
    %104 = vector.load %arg12[%c0_49, %c0_50] : memref<64x1xf32, #tpu.memory_space<vmem>>, vector<64x1xf32>
    %105 = arith.mulf %94, %103 : vector<64x1xf32>
    %106 = arith.subf %104, %105 : vector<64x1xf32>
    %107 = vector.broadcast %103 : vector<64x1xf32> to vector<64x98xf32>
    %108 = arith.mulf %87, %107 : vector<64x98xf32>
    %109 = vector.broadcast %106 : vector<64x1xf32> to vector<64x98xf32>
    %110 = arith.addf %108, %109 : vector<64x98xf32>
    %cst_51 = arith.constant 2.000000e-01 : f32
    %111 = vector.broadcast %cst_51 : f32 to vector<64x98xf32>
    %112 = arith.mulf %111, %110 : vector<64x98xf32>
    %113 = arith.maximumf %110, %112 : vector<64x98xf32>
    %c0_52 = arith.constant 0 : index
    %c0_53 = arith.constant 0 : index
    %114 = vector.load %arg13[%c0_52, %c0_53] : memref<64x98xf32, #tpu.memory_space<vmem>>, vector<64x98xf32>
    %115 = arith.mulf %113, %114 : vector<64x98xf32>
    %cst_54 = arith.constant dense<0.000000e+00> : vector<98xf32>
    %116 = vector.multi_reduction <add>, %115, %cst_54 [0] : vector<64x98xf32> to vector<98xf32>
    %117 = vector.shape_cast %116 : vector<98xf32> to vector<1x98xf32>
    %c0_55 = arith.constant 0 : index
    %c0_56 = arith.constant 0 : index
    %118 = vector.load %arg14[%c0_55, %c0_56] : memref<98x2xf32, #tpu.memory_space<vmem>>, vector<98x2xf32>
    %cst_57 = arith.constant dense<0.000000e+00> : vector<1x2xf32>
    %119 = tpu.matmul %117, %118, %cst_57 {dimension_numbers = #tpu.dot_dimension_numbers<[1], [0], [0], [1], [0, 0, 1, 1], [], []>} : vector<1x98xf32>, vector<98x2xf32>, vector<1x2xf32> -> vector<1x2xf32>
    %cst_58 = arith.constant 0.000000e+00 : f32
    %120 = vector.broadcast %cst_58 : f32 to vector<1x2xf32>
    %121 = arith.subf %120, %119 : vector<1x2xf32>
    %122 = math.exp %121 : vector<1x2xf32>
    %cst_59 = arith.constant 1.000000e+00 : f32
    %123 = vector.broadcast %cst_59 : f32 to vector<1x2xf32>
    %124 = arith.addf %123, %122 : vector<1x2xf32>
    %cst_60 = arith.constant 1.000000e+00 : f32
    %125 = vector.broadcast %cst_60 : f32 to vector<1x2xf32>
    %126 = arith.divf %125, %124 : vector<1x2xf32>
    %c0_61 = arith.constant 0 : index
    %c0_62 = arith.constant 0 : index
    %127 = vector.load %arg15[%c0_61, %c0_62] : memref<1x2xf32, #tpu.memory_space<vmem>>, vector<1x2xf32>
    tpu.vector_store %arg15[%c0_61, %c0_62], %126 {strides = array<i32>} : memref<1x2xf32, #tpu.memory_space<vmem>>, vector<1x2xf32>,
    return
  }
}

</mosaic_0001>

<llo_original>
// kernel: discriminator_forward.1
$region0: #{discriminator_forward.1}
  #allocation0 [shape = 'u32[]', space=smem, size = 0x4, offset = 0x4, fixed_abs, tag = 'smem constant byte address 0x4 - core index']
  #allocation1 [shape = 'u32[144,128]{1,0:T(1,128)}', space=vmem, size = 0x12000, scoped, tag = 'internal scratch']
  %s0 = inlined_call_operand.vmem [shape: f32[3,392], index: 0, kind: input, shape index: {}]
  %s1 = inlined_call_operand.vmem [shape: f32[8,3], index: 1, kind: input, shape index: {}]
  %s2 = inlined_call_operand.vmem [shape: f32[8,1], index: 2, kind: input, shape index: {}]
  %s3 = inlined_call_operand.vmem [shape: f32[8,1], index: 3, kind: input, shape index: {}]
  %s4 = inlined_call_operand.vmem [shape: f32[16,8], index: 4, kind: input, shape index: {}]
  %s5 = inlined_call_operand.vmem [shape: f32[16,1], index: 5, kind: input, shape index: {}]
  %s6 = inlined_call_operand.vmem [shape: f32[16,1], index: 6, kind: input, shape index: {}]
  %s7 = inlined_call_operand.vmem [shape: f32[32,16], index: 7, kind: input, shape index: {}]
  %s8 = inlined_call_operand.vmem [shape: f32[32,1], index: 8, kind: input, shape index: {}]
  %s9 = inlined_call_operand.vmem [shape: f32[32,1], index: 9, kind: input, shape index: {}]
  %s10 = inlined_call_operand.vmem [shape: f32[64,32], index: 10, kind: input, shape index: {}]
  %s11 = inlined_call_operand.vmem [shape: f32[64,1], index: 11, kind: input, shape index: {}]
  %s12 = inlined_call_operand.vmem [shape: f32[64,1], index: 12, kind: input, shape index: {}]
  %s13 = inlined_call_operand.vmem [shape: f32[64,98], index: 13, kind: input, shape index: {}]
  %s14 = inlined_call_operand.vmem [shape: f32[98,2], index: 14, kind: input, shape index: {}]
  %s15 = inlined_call_operand.hbm [shape: f32[1,2], index: 15, kind: output, shape index: {}]
  %s16 = sld [smem:[#allocation0]]
  $region70: #{discriminator_forward.1} parent=0
    _
  %s18 = ssub.s32 1, %s16
  %s19 = scalar_select 0, %s18, %s16
  $region1: #{discriminator_forward.1} parent=0
    #allocation2 [shape = 'u8[512]{0}', space=vmem, size = 0x400, scoped, tag = 'output window, operand 0, single buffered']
    #allocation3 [shape = 's32[1]{0}', space=sflag, size = 0x4, scoped, tag = 'scoped memory for discriminator_forward.1']
    %20 = vsyncpa [#allocation3], 0
    // Predicated region
    $region2: #{discriminator_forward.1} parent=1 // pred_check
      _
    $region3: #{discriminator_forward.1} parent=1 // pred_check_branch
      %22 = sbr.rel (0) target = $region5
    $region4: #{discriminator_forward.1} parent=1 // pred_region
      _
    $region5: #{discriminator_forward.1} parent=1 // pred_fallthru
      _
    // Predicated region
    $region6: #{discriminator_forward.1} parent=1 // pred_check
      _
    $region7: #{discriminator_forward.1} parent=1 // pred_check_branch
      %24 = sbr.rel (0) target = $region9
    $region8: #{discriminator_forward.1} parent=1 // pred_region
      _
    $region9: #{discriminator_forward.1} parent=1 // pred_fallthru
      _
    // Predicated region
    $region10: #{discriminator_forward.1} parent=1 // pred_check
      _
    $region11: #{discriminator_forward.1} parent=1 // pred_check_branch
      %26 = sbr.rel (0) target = $region13
    $region12: #{discriminator_forward.1} parent=1 // pred_region
      _
    $region13: #{discriminator_forward.1} parent=1 // pred_fallthru
      _
    // Predicated region
    $region14: #{discriminator_forward.1} parent=1 // pred_check
      _
    $region15: #{discriminator_forward.1} parent=1 // pred_check_branch
      %28 = sbr.rel (0) target = $region17
    $region16: #{discriminator_forward.1} parent=1 // pred_region
      _
    $region17: #{discriminator_forward.1} parent=1 // pred_fallthru
      _
    // Predicated region
    $region18: #{discriminator_forward.1} parent=1 // pred_check
      _
    $region19: #{discriminator_forward.1} parent=1 // pred_check_branch
      %30 = sbr.rel (0) target = $region21
    $region20: #{discriminator_forward.1} parent=1 // pred_region
      _
    $region21: #{discriminator_forward.1} parent=1 // pred_fallthru
      _
    // Predicated region
    $region22: #{discriminator_forward.1} parent=1 // pred_check
      _
    $region23: #{discriminator_forward.1} parent=1 // pred_check_branch
      %32 = sbr.rel (0) target = $region25
    $region24: #{discriminator_forward.1} parent=1 // pred_region
      _
    $region25: #{discriminator_forward.1} parent=1 // pred_fallthru
      _
    // Predicated region
    $region26: #{discriminator_forward.1} parent=1 // pred_check
      _
    $region27: #{discriminator_forward.1} parent=1 // pred_check_branch
      %34 = sbr.rel (0) target = $region29
    $region28: #{discriminator_forward.1} parent=1 // pred_region
      _
    $region29: #{discriminator_forward.1} parent=1 // pred_fallthru
      _
    // Predicated region
    $region30: #{discriminator_forward.1} parent=1 // pred_check
      _
    $region31: #{discriminator_forward.1} parent=1 // pred_check_branch
      %36 = sbr.rel (0) target = $region33
    $region32: #{discriminator_forward.1} parent=1 // pred_region
      _
    $region33: #{discriminator_forward.1} parent=1 // pred_fallthru
      _
    // Predicated region
    $region34: #{discriminator_forward.1} parent=1 // pred_check
      _
    $region35: #{discriminator_forward.1} parent=1 // pred_check_branch
      %38 = sbr.rel (0) target = $region37
    $region36: #{discriminator_forward.1} parent=1 // pred_region
      _
    $region37: #{discriminator_forward.1} parent=1 // pred_fallthru
      _
    // Predicated region
    $region38: #{discriminator_forward.1} parent=1 // pred_check
      _
    $region39: #{discriminator_forward.1} parent=1 // pred_check_branch
      %40 = sbr.rel (0) target = $region41
    $region40: #{discriminator_forward.1} parent=1 // pred_region
      _
    $region41: #{discriminator_forward.1} parent=1 // pred_fallthru
      _
    // Predicated region
    $region42: #{discriminator_forward.1} parent=1 // pred_check
      _
    $region43: #{discriminator_forward.1} parent=1 // pred_check_branch
      %42 = sbr.rel (0) target = $region45
    $region44: #{discriminator_forward.1} parent=1 // pred_region
      _
    $region45: #{discriminator_forward.1} parent=1 // pred_fallthru
      _
    // Predicated region
    $region46: #{discriminator_forward.1} parent=1 // pred_check
      _
    $region47: #{discriminator_forward.1} parent=1 // pred_check_branch
      %44 = sbr.rel (0) target = $region49
    $region48: #{discriminator_forward.1} parent=1 // pred_region
      _
    $region49: #{discriminator_forward.1} parent=1 // pred_fallthru
      _
    // Predicated region
    $region50: #{discriminator_forward.1} parent=1 // pred_check
      _
    $region51: #{discriminator_forward.1} parent=1 // pred_check_branch
      %46 = sbr.rel (0) target = $region53
    $region52: #{discriminator_forward.1} parent=1 // pred_region
      _
    $region53: #{discriminator_forward.1} parent=1 // pred_fallthru
      _
    // Predicated region
    $region54: #{discriminator_forward.1} parent=1 // pred_check
      _
    $region55: #{discriminator_forward.1} parent=1 // pred_check_branch
      %48 = sbr.rel (0) target = $region57
    $region56: #{discriminator_forward.1} parent=1 // pred_region
      _
    $region57: #{discriminator_forward.1} parent=1 // pred_fallthru
      _
    // Predicated region
    $region58: #{discriminator_forward.1} parent=1 // pred_check
      _
    $region59: #{discriminator_forward.1} parent=1 // pred_check_branch
      %50 = sbr.rel (0) target = $region61
    $region60: #{discriminator_forward.1} parent=1 // pred_region
      _
    $region61: #{discriminator_forward.1} parent=1 // pred_fallthru
      _
    %v51 = vld [vmem:[%s0] sm:$0x77]
    %v52 = vld [vmem:[%s0 + $0x8] sm:$0x77]
    %v53 = vld [vmem:[%s1] sm:$0xff]
    %v56 = vcombine.high %v51, %v51
    %v57 = vcombine.high %v52, %v52
    %vm58 = vcmask 23552
    %v60 = vsel %vm58, %v53, 0
    %vm62 = vcmask 1042432
    %v63 = vsel %vm62, %v51, 0
    %v65 = vsel %vm62, %v56, 0
    %v67 = vsel %vm62, %v52, 0
    %v69 = vsel %vm62, %v57, 0
    %71 = vmatprep.subr.mxu0 0.0
    %72 = vmatpush1.msra.mxu0 0.0
    %73 = vmatprep.subr.mxu0 0.0
    %74 = vmatpush1.msra.mxu0 0.0
    %75 = vmatprep.subr.mxu0 0.0
    %76 = vmatpush1.msra.mxu0 0.0
    %77 = vmatprep.subr.mxu0 0.0
    %78 = vmatpush1.msra.mxu0 0.0
    %79 = vmatprep.subr.mxu0 0.0
    %80 = vmatpush1.msra.mxu0 0.0
    %81 = vmatprep.subr.mxu0 0.0
    %82 = vmatpush1.msra.mxu0 0.0
    %83 = vmatprep.subr.mxu0 0.0
    %84 = vmatpush1.msra.mxu0 0.0
    %85 = vmatprep.subr.mxu0 0.0
    %86 = vmatpush1.msra.mxu0 0.0
    %87 = vmatprep.subr.mxu0 0.0
    %88 = vmatpush1.msra.mxu0 0.0
    %89 = vmatprep.subr.mxu0 0.0
    %90 = vmatpush1.msra.mxu0 0.0
    %91 = vmatprep.subr.mxu0 0.0
    %92 = vmatpush1.msra.mxu0 0.0
    %93 = vmatprep.subr.mxu0 0.0
    %94 = vmatpush1.msra.mxu0 0.0
    %95 = vmatprep.subr.mxu0 0.0
    %96 = vmatpush1.msra.mxu0 0.0
    %97 = vmatprep.subr.mxu0 0.0
    %98 = vmatpush1.msra.mxu0 0.0
    %99 = vmatprep.subr.mxu0 0.0
    %100 = vmatpush1.msra.mxu0 0.0
    %101 = vmatprep.subr.mxu0 %v65
    %102 = vmatpush1.msra.mxu0 %v63
    %103 = vmatprep.subr.mxu0 0.0
    %104 = vmatpush2.msra.mxu0 0.0
    %105 = vmatprep.subr.mxu0 0.0
    %106 = vmatpush2.msra.mxu0 0.0
    %107 = vmatprep.subr.mxu0 0.0
    %108 = vmatpush2.msra.mxu0 0.0
    %109 = vmatprep.subr.mxu0 0.0
    %110 = vmatpush2.msra.mxu0 0.0
    %111 = vmatprep.subr.mxu0 0.0
    %112 = vmatpush2.msra.mxu0 0.0
    %113 = vmatprep.subr.mxu0 0.0
    %114 = vmatpush2.msra.mxu0 0.0
    %115 = vmatprep.subr.mxu0 0.0
    %116 = vmatpush2.msra.mxu0 0.0
    %117 = vmatprep.subr.mxu0 0.0
    %118 = vmatpush2.msra.mxu0 0.0
    %119 = vmatprep.subr.mxu0 0.0
    %120 = vmatpush2.msra.mxu0 0.0
    %121 = vmatprep.subr.mxu0 0.0
    %122 = vmatpush2.msra.mxu0 0.0
    %123 = vmatprep.subr.mxu0 0.0
    %124 = vmatpush2.msra.mxu0 0.0
    %125 = vmatprep.subr.mxu0 0.0
    %126 = vmatpush2.msra.mxu0 0.0
    %127 = vmatprep.subr.mxu0 0.0
    %128 = vmatpush2.msra.mxu0 0.0
    %129 = vmatprep.subr.mxu0 0.0
    %130 = vmatpush2.msra.mxu0 0.0
    %131 = vmatprep.subr.mxu0 0.0
    %132 = vmatpush2.msra.mxu0 0.0
    %133 = vmatprep.subr.mxu0 0.0
    %134 = vmatpush2.msra.mxu0 0.0
    %135 = vmatprep.mubr.f32.mxu0 0.0
    %136 = vmatmul.mubr.f32.gmra.mxu0 %v60
    %v137 = vpop.f32.mrf.mxu0
    %v138 = vadd.f32 0.0, %v137
    %v139 = vpop.f32.mrf.mxu0
    %v140 = vadd.f32 0.0, %v139
    %141 = vdwg.mxu0
    %142 = vmatprep.subr.mxu0 0.0
    %143 = vmatpush1.msra.mxu0 0.0
    %144 = vmatprep.subr.mxu0 0.0
    %145 = vmatpush1.msra.mxu0 0.0
    %146 = vmatprep.subr.mxu0 0.0
    %147 = vmatpush1.msra.mxu0 0.0
    %148 = vmatprep.subr.mxu0 0.0
    %149 = vmatpush1.msra.mxu0 0.0
    %150 = vmatprep.subr.mxu0 0.0
    %151 = vmatpush1.msra.mxu0 0.0
    %152 = vmatprep.subr.mxu0 0.0
    %153 = vmatpush1.msra.mxu0 0.0
    %154 = vmatprep.subr.mxu0 0.0
    %155 = vmatpush1.msra.mxu0 0.0
    %156 = vmatprep.subr.mxu0 0.0
    %157 = vmatpush1.msra.mxu0 0.0
    %158 = vmatprep.subr.mxu0 0.0
    %159 = vmatpush1.msra.mxu0 0.0
    %160 = vmatprep.subr.mxu0 0.0
    %161 = vmatpush1.msra.mxu0 0.0
    %162 = vmatprep.subr.mxu0 0.0
    %163 = vmatpush1.msra.mxu0 0.0
    %164 = vmatprep.subr.mxu0 0.0
    %165 = vmatpush1.msra.mxu0 0.0
    %166 = vmatprep.subr.mxu0 0.0
    %167 = vmatpush1.msra.mxu0 0.0
    %168 = vmatprep.subr.mxu0 0.0
    %169 = vmatpush1.msra.mxu0 0.0
    %170 = vmatprep.subr.mxu0 0.0
    %171 = vmatpush1.msra.mxu0 0.0
    %172 = vmatprep.subr.mxu0 %v69
    %173 = vmatpush1.msra.mxu0 %v67
    %174 = vmatprep.subr.mxu0 0.0
    %175 = vmatpush2.msra.mxu0 0.0
    %176 = vmatprep.subr.mxu0 0.0
    %177 = vmatpush2.msra.mxu0 0.0
    %178 = vmatprep.subr.mxu0 0.0
    %179 = vmatpush2.msra.mxu0 0.0
    %180 = vmatprep.subr.mxu0 0.0
    %181 = vmatpush2.msra.mxu0 0.0
    %182 = vmatprep.subr.mxu0 0.0
    %183 = vmatpush2.msra.mxu0 0.0
    %184 = vmatprep.subr.mxu0 0.0
    %185 = vmatpush2.msra.mxu0 0.0
    %186 = vmatprep.subr.mxu0 0.0
    %187 = vmatpush2.msra.mxu0 0.0
    %188 = vmatprep.subr.mxu0 0.0
    %189 = vmatpush2.msra.mxu0 0.0
    %190 = vmatprep.subr.mxu0 0.0
    %191 = vmatpush2.msra.mxu0 0.0
    %192 = vmatprep.subr.mxu0 0.0
    %193 = vmatpush2.msra.mxu0 0.0
    %194 = vmatprep.subr.mxu0 0.0
    %195 = vmatpush2.msra.mxu0 0.0
    %196 = vmatprep.subr.mxu0 0.0
    %197 = vmatpush2.msra.mxu0 0.0
    %198 = vmatprep.subr.mxu0 0.0
    %199 = vmatpush2.msra.mxu0 0.0
    %200 = vmatprep.subr.mxu0 0.0
    %201 = vmatpush2.msra.mxu0 0.0
    %202 = vmatprep.subr.mxu0 0.0
    %203 = vmatpush2.msra.mxu0 0.0
    %204 = vmatprep.subr.mxu0 0.0
    %205 = vmatpush2.msra.mxu0 0.0
    %206 = vmatprep.mubr.f32.mxu0 0.0
    %207 = vmatmul.mubr.f32.gmra.mxu0 %v60
    %v208 = vpop.f32.mrf.mxu0
    %v209 = vadd.f32 0.0, %v208
    %v210 = vpop.f32.mrf.mxu0
    %v211 = vadd.f32 0.0, %v210
    %212 = vdwg.mxu0
    %v213 = vadd.f32 %v138, %v140
    %v214 = vadd.f32 %v213, %v209
    %vm215 = vcmask 64512
    %v216 = vsel %vm215, %v211, 0.0
    %v217 = vadd.f32 %v214, %v216
    %218 = vadd.xlane.f32.xlu0 %v217
    %v219 = vpop.xlane.xlu0 %218
    %v220 = vmul.f32 %v138, %v138
    %v221 = vmul.f32 %v140, %v140
    %v222 = vmul.f32 %v209, %v209
    %v223 = vmul.f32 %v211, %v211
    %v224 = vadd.f32 %v220, %v221
    %v225 = vadd.f32 %v224, %v222
    %v226 = vsel %vm215, %v223, 0.0
    %v227 = vadd.f32 %v225, %v226
    %228 = vadd.xlane.f32.xlu0 %v227
    %v229 = vpop.xlane.xlu0 %228
    %v230 = vmul.f32 %v219, 0.0025510204
    %v231 = vmul.f32 %v229, 0.0025510204
    %v232 = vmul.f32 %v230, %v230
    %v233 = vsub.f32 %v231, %v232
    %v234 = vld [vmem:[%s2] sm:$0xff]
    %v235 = vadd.f32 %v233, 1e-05
    %v236 = vrsqrt.pop %v235
    %v237 = vmul.f32 %v234, %v236
    %v238 = vld [vmem:[%s3] sm:$0xff]
    %v239 = vmul.f32 %v230, %v237
    %v240 = vsub.f32 %v238, %v239
    %242 = vset.pattern.permute.xlu0 0
    %243 = vperm.xlu0 %242, %v237
    %v244 = vpop.permute.xlu0 %243
    %v246 = vmul.f32 %v138, %v244
    %248 = vset.pattern.permute.xlu0 0
    %249 = vperm.xlu0 %248, %v240
    %v250 = vpop.permute.xlu0 %249
    %v252 = vadd.f32 %v246, %v250
    %v253 = vmul.f32 %v252, 0.2
    %v254 = vmax.f32 %v252, %v253
    %v255 = vld [vmem:[%s4] sm:$0xff]
    %v256 = vld [vmem:[%s4 + $0x8] sm:$0xff]
    %v258 = vsel %vm215, %v255, 0
    %v261 = vsel %vm215, %v256, 0
    %263 = vmatprep.subr.mxu0 0.0
    %264 = vmatpush1.msra.mxu0 0.0
    %265 = vmatprep.subr.mxu0 0.0
    %266 = vmatpush1.msra.mxu0 0.0
    %267 = vmatprep.subr.mxu0 0.0
    %268 = vmatpush1.msra.mxu0 0.0
    %269 = vmatprep.subr.mxu0 0.0
    %270 = vmatpush1.msra.mxu0 0.0
    %271 = vmatprep.subr.mxu0 0.0
    %272 = vmatpush1.msra.mxu0 0.0
    %273 = vmatprep.subr.mxu0 0.0
    %274 = vmatpush1.msra.mxu0 0.0
    %275 = vmatprep.subr.mxu0 0.0
    %276 = vmatpush1.msra.mxu0 0.0
    %277 = vmatprep.subr.mxu0 0.0
    %278 = vmatpush1.msra.mxu0 0.0
    %279 = vmatprep.subr.mxu0 0.0
    %280 = vmatpush1.msra.mxu0 0.0
    %281 = vmatprep.subr.mxu0 0.0
    %282 = vmatpush1.msra.mxu0 0.0
    %283 = vmatprep.subr.mxu0 0.0
    %284 = vmatpush1.msra.mxu0 0.0
    %285 = vmatprep.subr.mxu0 0.0
    %286 = vmatpush1.msra.mxu0 0.0
    %287 = vmatprep.subr.mxu0 0.0
    %288 = vmatpush1.msra.mxu0 0.0
    %289 = vmatprep.subr.mxu0 0.0
    %290 = vmatpush1.msra.mxu0 0.0
    %291 = vmatprep.subr.mxu0 0.0
    %292 = vmatpush1.msra.mxu0 0.0
    %293 = vmatprep.subr.mxu0 0.0
    %294 = vmatpush1.msra.mxu0 %v254
    %295 = vmatprep.subr.mxu0 0.0
    %296 = vmatpush2.msra.mxu0 0.0
    %297 = vmatprep.subr.mxu0 0.0
    %298 = vmatpush2.msra.mxu0 0.0
    %299 = vmatprep.subr.mxu0 0.0
    %300 = vmatpush2.msra.mxu0 0.0
    %301 = vmatprep.subr.mxu0 0.0
    %302 = vmatpush2.msra.mxu0 0.0
    %303 = vmatprep.subr.mxu0 0.0
    %304 = vmatpush2.msra.mxu0 0.0
    %305 = vmatprep.subr.mxu0 0.0
    %306 = vmatpush2.msra.mxu0 0.0
    %307 = vmatprep.subr.mxu0 0.0
    %308 = vmatpush2.msra.mxu0 0.0
    %309 = vmatprep.subr.mxu0 0.0
    %310 = vmatpush2.msra.mxu0 0.0
    %311 = vmatprep.subr.mxu0 0.0
    %312 = vmatpush2.msra.mxu0 0.0
    %313 = vmatprep.subr.mxu0 0.0
    %314 = vmatpush2.msra.mxu0 0.0
    %315 = vmatprep.subr.mxu0 0.0
    %316 = vmatpush2.msra.mxu0 0.0
    %317 = vmatprep.subr.mxu0 0.0
    %318 = vmatpush2.msra.mxu0 0.0
    %319 = vmatprep.subr.mxu0 0.0
    %320 = vmatpush2.msra.mxu0 0.0
    %321 = vmatprep.subr.mxu0 0.0
    %322 = vmatpush2.msra.mxu0 0.0
    %323 = vmatprep.subr.mxu0 0.0
    %324 = vmatpush2.msra.mxu0 0.0
    %325 = vmatprep.subr.mxu0 0.0
    %326 = vmatpush2.msra.mxu0 0.0
    %327 = vmatprep.mubr.f32.mxu0 0.0
    %328 = vmatmul.mubr.f32.gmra.mxu0 %v258
    %v329 = vpop.f32.mrf.mxu0
    %v330 = vadd.f32 0.0, %v329
    %v331 = vpop.f32.mrf.mxu0
    %332 = vmatprep.mubr.f32.mxu0 0.0
    %333 = vmatmul.mubr.f32.gmra.mxu0 %v261
    %v334 = vpop.f32.mrf.mxu0
    %v335 = vadd.f32 0.0, %v334
    %v336 = vpop.f32.mrf.mxu0
    %337 = vdwg.mxu0
    %vm338 = vcmask 801792
    %v339 = vsel %vm338, %v330, 0.0
    %340 = vadd.xlane.f32.xlu0 %v339
    %v341 = vpop.xlane.xlu0 %340
    %v342 = vsel %vm338, %v335, 0.0
    %343 = vadd.xlane.f32.xlu0 %v342
    %v344 = vpop.xlane.xlu0 %343
    %v345 = vmul.f32 %v330, %v330
    %v346 = vmul.f32 %v335, %v335
    %v347 = vsel %vm338, %v345, 0.0
    %348 = vadd.xlane.f32.xlu0 %v347
    %v349 = vpop.xlane.xlu0 %348
    %v350 = vsel %vm338, %v346, 0.0
    %351 = vadd.xlane.f32.xlu0 %v350
    %v352 = vpop.xlane.xlu0 %351
    %v353 = vmul.f32 %v341, 0.010204081
    %v354 = vmul.f32 %v344, 0.010204081
    %v355 = vmul.f32 %v349, 0.010204081
    %v356 = vmul.f32 %v352, 0.010204081
    %v357 = vmul.f32 %v353, %v353
    %v358 = vmul.f32 %v354, %v354
    %v359 = vsub.f32 %v355, %v357
    %v360 = vsub.f32 %v356, %v358
    %v361 = vld [vmem:[%s5] sm:$0xff]
    %v362 = vld [vmem:[%s5 + $0x8] sm:$0xff]
    %v363 = vadd.f32 %v359, 1e-05
    %v364 = vadd.f32 %v360, 1e-05
    %v365 = vrsqrt.pop %v363
    %v366 = vrsqrt.pop %v364
    %v367 = vmul.f32 %v361, %v365
    %v368 = vmul.f32 %v362, %v366
    %v369 = vld [vmem:[%s6] sm:$0xff]
    %v370 = vld [vmem:[%s6 + $0x8] sm:$0xff]
    %v371 = vmul.f32 %v353, %v367
    %v372 = vmul.f32 %v354, %v368
    %v373 = vsub.f32 %v369, %v371
    %v374 = vsub.f32 %v370, %v372
    %376 = vset.pattern.permute.xlu0 0
    %377 = vperm.xlu0 %376, %v367
    %v378 = vpop.permute.xlu0 %377
    %381 = vset.pattern.permute.xlu0 0
    %382 = vperm.xlu0 %381, %v368
    %v383 = vpop.permute.xlu0 %382
    %v385 = vmul.f32 %v330, %v378
    %v386 = vmul.f32 %v335, %v383
    %388 = vset.pattern.permute.xlu0 0
    %389 = vperm.xlu0 %388, %v373
    %v390 = vpop.permute.xlu0 %389
    %393 = vset.pattern.permute.xlu0 0
    %394 = vperm.xlu0 %393, %v374
    %v395 = vpop.permute.xlu0 %394
    %v397 = vadd.f32 %v385, %v390
    %v398 = vadd.f32 %v386, %v395
    %v399 = vmul.f32 %v397, 0.2
    %v400 = vmul.f32 %v398, 0.2
    %v401 = vmax.f32 %v397, %v399
    %v402 = vmax.f32 %v398, %v400
    %v403 = vld [vmem:[%s7] sm:$0xff]
    %v404 = vld [vmem:[%s7 + $0x8] sm:$0xff]
    %v405 = vld [vmem:[%s7 + $0x10] sm:$0xff]
    %v406 = vld [vmem:[%s7 + $0x18] sm:$0xff]
    %vm407 = vcmask 130048
    %v409 = vsel %vm407, %v403, 0
    %v412 = vsel %vm407, %v404, 0
    %v415 = vsel %vm407, %v405, 0
    %v418 = vsel %vm407, %v406, 0
    %420 = vmatprep.subr.mxu0 0.0
    %421 = vmatpush1.msra.mxu0 0.0
    %422 = vmatprep.subr.mxu0 0.0
    %423 = vmatpush1.msra.mxu0 0.0
    %424 = vmatprep.subr.mxu0 0.0
    %425 = vmatpush1.msra.mxu0 0.0
    %426 = vmatprep.subr.mxu0 0.0
    %427 = vmatpush1.msra.mxu0 0.0
    %428 = vmatprep.subr.mxu0 0.0
    %429 = vmatpush1.msra.mxu0 0.0
    %430 = vmatprep.subr.mxu0 0.0
    %431 = vmatpush1.msra.mxu0 0.0
    %432 = vmatprep.subr.mxu0 0.0
    %433 = vmatpush1.msra.mxu0 0.0
    %434 = vmatprep.subr.mxu0 0.0
    %435 = vmatpush1.msra.mxu0 0.0
    %436 = vmatprep.subr.mxu0 0.0
    %437 = vmatpush1.msra.mxu0 0.0
    %438 = vmatprep.subr.mxu0 0.0
    %439 = vmatpush1.msra.mxu0 0.0
    %440 = vmatprep.subr.mxu0 0.0
    %441 = vmatpush1.msra.mxu0 0.0
    %442 = vmatprep.subr.mxu0 0.0
    %443 = vmatpush1.msra.mxu0 0.0
    %444 = vmatprep.subr.mxu0 0.0
    %445 = vmatpush1.msra.mxu0 0.0
    %446 = vmatprep.subr.mxu0 0.0
    %447 = vmatpush1.msra.mxu0 0.0
    %448 = vmatprep.subr.mxu0 0.0
    %449 = vmatpush1.msra.mxu0 %v402
    %450 = vmatprep.subr.mxu0 0.0
    %451 = vmatpush1.msra.mxu0 %v401
    %452 = vmatprep.subr.mxu0 0.0
    %453 = vmatpush2.msra.mxu0 0.0
    %454 = vmatprep.subr.mxu0 0.0
    %455 = vmatpush2.msra.mxu0 0.0
    %456 = vmatprep.subr.mxu0 0.0
    %457 = vmatpush2.msra.mxu0 0.0
    %458 = vmatprep.subr.mxu0 0.0
    %459 = vmatpush2.msra.mxu0 0.0
    %460 = vmatprep.subr.mxu0 0.0
    %461 = vmatpush2.msra.mxu0 0.0
    %462 = vmatprep.subr.mxu0 0.0
    %463 = vmatpush2.msra.mxu0 0.0
    %464 = vmatprep.subr.mxu0 0.0
    %465 = vmatpush2.msra.mxu0 0.0
    %466 = vmatprep.subr.mxu0 0.0
    %467 = vmatpush2.msra.mxu0 0.0
    %468 = vmatprep.subr.mxu0 0.0
    %469 = vmatpush2.msra.mxu0 0.0
    %470 = vmatprep.subr.mxu0 0.0
    %471 = vmatpush2.msra.mxu0 0.0
    %472 = vmatprep.subr.mxu0 0.0
    %473 = vmatpush2.msra.mxu0 0.0
    %474 = vmatprep.subr.mxu0 0.0
    %475 = vmatpush2.msra.mxu0 0.0
    %476 = vmatprep.subr.mxu0 0.0
    %477 = vmatpush2.msra.mxu0 0.0
    %478 = vmatprep.subr.mxu0 0.0
    %479 = vmatpush2.msra.mxu0 0.0
    %480 = vmatprep.subr.mxu0 0.0
    %481 = vmatpush2.msra.mxu0 0.0
    %482 = vmatprep.subr.mxu0 0.0
    %483 = vmatpush2.msra.mxu0 0.0
    %484 = vmatprep.mubr.f32.mxu0 0.0
    %485 = vmatmul.mubr.f32.gmra.mxu0 %v409
    %v486 = vpop.f32.mrf.mxu0
    %v487 = vadd.f32 0.0, %v486
    %v488 = vpop.f32.mrf.mxu0
    %489 = vmatprep.mubr.f32.mxu0 0.0
    %490 = vmatmul.mubr.f32.gmra.mxu0 %v412
    %v491 = vpop.f32.mrf.mxu0
    %v492 = vadd.f32 0.0, %v491
    %v493 = vpop.f32.mrf.mxu0
    %494 = vmatprep.mubr.f32.mxu0 0.0
    %495 = vmatmul.mubr.f32.gmra.mxu0 %v415
    %v496 = vpop.f32.mrf.mxu0
    %v497 = vadd.f32 0.0, %v496
    %v498 = vpop.f32.mrf.mxu0
    %499 = vmatprep.mubr.f32.mxu0 0.0
    %500 = vmatmul.mubr.f32.gmra.mxu0 %v418
    %v501 = vpop.f32.mrf.mxu0
    %v502 = vadd.f32 0.0, %v501
    %v503 = vpop.f32.mrf.mxu0
    %504 = vdwg.mxu0
    %v505 = vsel %vm338, %v487, 0.0
    %506 = vadd.xlane.f32.xlu0 %v505
    %v507 = vpop.xlane.xlu0 %506
    %v508 = vsel %vm338, %v492, 0.0
    %509 = vadd.xlane.f32.xlu0 %v508
    %v510 = vpop.xlane.xlu0 %509
    %v511 = vsel %vm338, %v497, 0.0
    %512 = vadd.xlane.f32.xlu0 %v511
    %v513 = vpop.xlane.xlu0 %512
    %v514 = vsel %vm338, %v502, 0.0
    %515 = vadd.xlane.f32.xlu0 %v514
    %v516 = vpop.xlane.xlu0 %515
    %v517 = vmul.f32 %v487, %v487
    %v518 = vmul.f32 %v492, %v492
    %v519 = vmul.f32 %v497, %v497
    %v520 = vmul.f32 %v502, %v502
    %v521 = vsel %vm338, %v517, 0.0
    %522 = vadd.xlane.f32.xlu0 %v521
    %v523 = vpop.xlane.xlu0 %522
    %v524 = vsel %vm338, %v518, 0.0
    %525 = vadd.xlane.f32.xlu0 %v524
    %v526 = vpop.xlane.xlu0 %525
    %v527 = vsel %vm338, %v519, 0.0
    %528 = vadd.xlane.f32.xlu0 %v527
    %v529 = vpop.xlane.xlu0 %528
    %v530 = vsel %vm338, %v520, 0.0
    %531 = vadd.xlane.f32.xlu0 %v530
    %v532 = vpop.xlane.xlu0 %531
    %v533 = vmul.f32 %v507, 0.010204081
    %v534 = vmul.f32 %v510, 0.010204081
    %v535 = vmul.f32 %v513, 0.010204081
    %v536 = vmul.f32 %v516, 0.010204081
    %v537 = vmul.f32 %v523, 0.010204081
    %v538 = vmul.f32 %v526, 0.010204081
    %v539 = vmul.f32 %v529, 0.010204081
    %v540 = vmul.f32 %v532, 0.010204081
    %v541 = vmul.f32 %v533, %v533
    %v542 = vmul.f32 %v534, %v534
    %v543 = vmul.f32 %v535, %v535
    %v544 = vmul.f32 %v536, %v536
    %v545 = vsub.f32 %v537, %v541
    %v546 = vsub.f32 %v538, %v542
    %v547 = vsub.f32 %v539, %v543
    %v548 = vsub.f32 %v540, %v544
    %v549 = vld [vmem:[%s8] sm:$0xff]
    %v550 = vld [vmem:[%s8 + $0x8] sm:$0xff]
    %v551 = vld [vmem:[%s8 + $0x10] sm:$0xff]
    %v552 = vld [vmem:[%s8 + $0x18] sm:$0xff]
    %v553 = vadd.f32 %v545, 1e-05
    %v554 = vadd.f32 %v546, 1e-05
    %v555 = vadd.f32 %v547, 1e-05
    %v556 = vadd.f32 %v548, 1e-05
    %v557 = vrsqrt.pop %v553
    %v558 = vrsqrt.pop %v554
    %v559 = vrsqrt.pop %v555
    %v560 = vrsqrt.pop %v556
    %v561 = vmul.f32 %v549, %v557
    %v562 = vmul.f32 %v550, %v558
    %v563 = vmul.f32 %v551, %v559
    %v564 = vmul.f32 %v552, %v560
    %v565 = vld [vmem:[%s9] sm:$0xff]
    %v566 = vld [vmem:[%s9 + $0x8] sm:$0xff]
    %v567 = vld [vmem:[%s9 + $0x10] sm:$0xff]
    %v568 = vld [vmem:[%s9 + $0x18] sm:$0xff]
    %v569 = vmul.f32 %v533, %v561
    %v570 = vmul.f32 %v534, %v562
    %v571 = vmul.f32 %v535, %v563
    %v572 = vmul.f32 %v536, %v564
    %v573 = vsub.f32 %v565, %v569
    %v574 = vsub.f32 %v566, %v570
    %v575 = vsub.f32 %v567, %v571
    %v576 = vsub.f32 %v568, %v572
    %578 = vset.pattern.permute.xlu0 0
    %579 = vperm.xlu0 %578, %v561
    %v580 = vpop.permute.xlu0 %579
    %583 = vset.pattern.permute.xlu0 0
    %584 = vperm.xlu0 %583, %v562
    %v585 = vpop.permute.xlu0 %584
    %588 = vset.pattern.permute.xlu0 0
    %589 = vperm.xlu0 %588, %v563
    %v590 = vpop.permute.xlu0 %589
    %593 = vset.pattern.permute.xlu0 0
    %594 = vperm.xlu0 %593, %v564
    %v595 = vpop.permute.xlu0 %594
    %v597 = vmul.f32 %v487, %v580
    %v598 = vmul.f32 %v492, %v585
    %v599 = vmul.f32 %v497, %v590
    %v600 = vmul.f32 %v502, %v595
    %602 = vset.pattern.permute.xlu0 0
    %603 = vperm.xlu0 %602, %v573
    %v604 = vpop.permute.xlu0 %603
    %607 = vset.pattern.permute.xlu0 0
    %608 = vperm.xlu0 %607, %v574
    %v609 = vpop.permute.xlu0 %608
    %612 = vset.pattern.permute.xlu0 0
    %613 = vperm.xlu0 %612, %v575
    %v614 = vpop.permute.xlu0 %613
    %617 = vset.pattern.permute.xlu0 0
    %618 = vperm.xlu0 %617, %v576
    %v619 = vpop.permute.xlu0 %618
    %v621 = vadd.f32 %v597, %v604
    %v622 = vadd.f32 %v598, %v609
    %v623 = vadd.f32 %v599, %v614
    %v624 = vadd.f32 %v600, %v619
    %v625 = vmul.f32 %v621, 0.2
    %v626 = vmul.f32 %v622, 0.2
    %v627 = vmul.f32 %v623, 0.2
    %v628 = vmul.f32 %v624, 0.2
    %v629 = vmax.f32 %v621, %v625
    %v630 = vmax.f32 %v622, %v626
    %v631 = vmax.f32 %v623, %v627
    %v632 = vmax.f32 %v624, %v628
    %v633 = vld [vmem:[%s10] sm:$0xff]
    %v634 = vld [vmem:[%s10 + $0x8] sm:$0xff]
    %v635 = vld [vmem:[%s10 + $0x10] sm:$0xff]
    %v636 = vld [vmem:[%s10 + $0x18] sm:$0xff]
    %v637 = vld [vmem:[%s10 + $0x20] sm:$0xff]
    %v638 = vld [vmem:[%s10 + $0x28] sm:$0xff]
    %v639 = vld [vmem:[%s10 + $0x30] sm:$0xff]
    %v640 = vld [vmem:[%s10 + $0x38] sm:$0xff]
    %vm641 = vcmask 261120
    %v643 = vsel %vm641, %v633, 0
    %v646 = vsel %vm641, %v634, 0
    %v649 = vsel %vm641, %v635, 0
    %v652 = vsel %vm641, %v636, 0
    %v655 = vsel %vm641, %v637, 0
    %v658 = vsel %vm641, %v638, 0
    %v661 = vsel %vm641, %v639, 0
    %v664 = vsel %vm641, %v640, 0
    %666 = vmatprep.subr.mxu0 0.0
    %667 = vmatpush1.msra.mxu0 0.0
    %668 = vmatprep.subr.mxu0 0.0
    %669 = vmatpush1.msra.mxu0 0.0
    %670 = vmatprep.subr.mxu0 0.0
    %671 = vmatpush1.msra.mxu0 0.0
    %672 = vmatprep.subr.mxu0 0.0
    %673 = vmatpush1.msra.mxu0 0.0
    %674 = vmatprep.subr.mxu0 0.0
    %675 = vmatpush1.msra.mxu0 0.0
    %676 = vmatprep.subr.mxu0 0.0
    %677 = vmatpush1.msra.mxu0 0.0
    %678 = vmatprep.subr.mxu0 0.0
    %679 = vmatpush1.msra.mxu0 0.0
    %680 = vmatprep.subr.mxu0 0.0
    %681 = vmatpush1.msra.mxu0 0.0
    %682 = vmatprep.subr.mxu0 0.0
    %683 = vmatpush1.msra.mxu0 0.0
    %684 = vmatprep.subr.mxu0 0.0
    %685 = vmatpush1.msra.mxu0 0.0
    %686 = vmatprep.subr.mxu0 0.0
    %687 = vmatpush1.msra.mxu0 0.0
    %688 = vmatprep.subr.mxu0 0.0
    %689 = vmatpush1.msra.mxu0 0.0
    %690 = vmatprep.subr.mxu0 0.0
    %691 = vmatpush1.msra.mxu0 %v632
    %692 = vmatprep.subr.mxu0 0.0
    %693 = vmatpush1.msra.mxu0 %v631
    %694 = vmatprep.subr.mxu0 0.0
    %695 = vmatpush1.msra.mxu0 %v630
    %696 = vmatprep.subr.mxu0 0.0
    %697 = vmatpush1.msra.mxu0 %v629
    %698 = vmatprep.subr.mxu0 0.0
    %699 = vmatpush2.msra.mxu0 0.0
    %700 = vmatprep.subr.mxu0 0.0
    %701 = vmatpush2.msra.mxu0 0.0
    %702 = vmatprep.subr.mxu0 0.0
    %703 = vmatpush2.msra.mxu0 0.0
    %704 = vmatprep.subr.mxu0 0.0
    %705 = vmatpush2.msra.mxu0 0.0
    %706 = vmatprep.subr.mxu0 0.0
    %707 = vmatpush2.msra.mxu0 0.0
    %708 = vmatprep.subr.mxu0 0.0
    %709 = vmatpush2.msra.mxu0 0.0
    %710 = vmatprep.subr.mxu0 0.0
    %711 = vmatpush2.msra.mxu0 0.0
    %712 = vmatprep.subr.mxu0 0.0
    %713 = vmatpush2.msra.mxu0 0.0
    %714 = vmatprep.subr.mxu0 0.0
    %715 = vmatpush2.msra.mxu0 0.0
    %716 = vmatprep.subr.mxu0 0.0
    %717 = vmatpush2.msra.mxu0 0.0
    %718 = vmatprep.subr.mxu0 0.0
    %719 = vmatpush2.msra.mxu0 0.0
    %720 = vmatprep.subr.mxu0 0.0
    %721 = vmatpush2.msra.mxu0 0.0
    %722 = vmatprep.subr.mxu0 0.0
    %723 = vmatpush2.msra.mxu0 0.0
    %724 = vmatprep.subr.mxu0 0.0
    %725 = vmatpush2.msra.mxu0 0.0
    %726 = vmatprep.subr.mxu0 0.0
    %727 = vmatpush2.msra.mxu0 0.0
    %728 = vmatprep.subr.mxu0 0.0
    %729 = vmatpush2.msra.mxu0 0.0
    %730 = vmatprep.mubr.f32.mxu0 0.0
    %731 = vmatmul.mubr.f32.gmra.mxu0 %v643
    %v732 = vpop.f32.mrf.mxu0
    %v733 = vadd.f32 0.0, %v732
    %v734 = vpop.f32.mrf.mxu0
    %735 = vmatprep.mubr.f32.mxu0 0.0
    %736 = vmatmul.mubr.f32.gmra.mxu0 %v646
    %v737 = vpop.f32.mrf.mxu0
    %v738 = vadd.f32 0.0, %v737
    %v739 = vpop.f32.mrf.mxu0
    %740 = vmatprep.mubr.f32.mxu0 0.0
    %741 = vmatmul.mubr.f32.gmra.mxu0 %v649
    %v742 = vpop.f32.mrf.mxu0
    %v743 = vadd.f32 0.0, %v742
    %v744 = vpop.f32.mrf.mxu0
    %745 = vmatprep.mubr.f32.mxu0 0.0
    %746 = vmatmul.mubr.f32.gmra.mxu0 %v652
    %v747 = vpop.f32.mrf.mxu0
    %v748 = vadd.f32 0.0, %v747
    %v749 = vpop.f32.mrf.mxu0
    %750 = vmatprep.mubr.f32.mxu0 0.0
    %751 = vmatmul.mubr.f32.gmra.mxu0 %v655
    %v752 = vpop.f32.mrf.mxu0
    %v753 = vadd.f32 0.0, %v752
    %v754 = vpop.f32.mrf.mxu0
    %755 = vmatprep.mubr.f32.mxu0 0.0
    %756 = vmatmul.mubr.f32.gmra.mxu0 %v658
    %v757 = vpop.f32.mrf.mxu0
    %v758 = vadd.f32 0.0, %v757
    %v759 = vpop.f32.mrf.mxu0
    %760 = vmatprep.mubr.f32.mxu0 0.0
    %761 = vmatmul.mubr.f32.gmra.mxu0 %v661
    %v762 = vpop.f32.mrf.mxu0
    %v763 = vadd.f32 0.0, %v762
    %v764 = vpop.f32.mrf.mxu0
    %765 = vmatprep.mubr.f32.mxu0 0.0
    %766 = vmatmul.mubr.f32.gmra.mxu0 %v664
    %v767 = vpop.f32.mrf.mxu0
    %v768 = vadd.f32 0.0, %v767
    %v769 = vpop.f32.mrf.mxu0
    %770 = vdwg.mxu0
    %v771 = vsel %vm338, %v733, 0.0
    %772 = vadd.xlane.f32.xlu0 %v771
    %v773 = vpop.xlane.xlu0 %772
    %v774 = vsel %vm338, %v738, 0.0
    %775 = vadd.xlane.f32.xlu0 %v774
    %v776 = vpop.xlane.xlu0 %775
    %v777 = vsel %vm338, %v743, 0.0
    %778 = vadd.xlane.f32.xlu0 %v777
    %v779 = vpop.xlane.xlu0 %778
    %v780 = vsel %vm338, %v748, 0.0
    %781 = vadd.xlane.f32.xlu0 %v780
    %v782 = vpop.xlane.xlu0 %781
    %v783 = vsel %vm338, %v753, 0.0
    %784 = vadd.xlane.f32.xlu0 %v783
    %v785 = vpop.xlane.xlu0 %784
    %v786 = vsel %vm338, %v758, 0.0
    %787 = vadd.xlane.f32.xlu0 %v786
    %v788 = vpop.xlane.xlu0 %787
    %v789 = vsel %vm338, %v763, 0.0
    %790 = vadd.xlane.f32.xlu0 %v789
    %v791 = vpop.xlane.xlu0 %790
    %v792 = vsel %vm338, %v768, 0.0
    %793 = vadd.xlane.f32.xlu0 %v792
    %v794 = vpop.xlane.xlu0 %793
    %v795 = vmul.f32 %v733, %v733
    %v796 = vmul.f32 %v738, %v738
    %v797 = vmul.f32 %v743, %v743
    %v798 = vmul.f32 %v748, %v748
    %v799 = vmul.f32 %v753, %v753
    %v800 = vmul.f32 %v758, %v758
    %v801 = vmul.f32 %v763, %v763
    %v802 = vmul.f32 %v768, %v768
    %v803 = vsel %vm338, %v795, 0.0
    %804 = vadd.xlane.f32.xlu0 %v803
    %v805 = vpop.xlane.xlu0 %804
    %v806 = vsel %vm338, %v796, 0.0
    %807 = vadd.xlane.f32.xlu0 %v806
    %v808 = vpop.xlane.xlu0 %807
    %v809 = vsel %vm338, %v797, 0.0
    %810 = vadd.xlane.f32.xlu0 %v809
    %v811 = vpop.xlane.xlu0 %810
    %v812 = vsel %vm338, %v798, 0.0
    %813 = vadd.xlane.f32.xlu0 %v812
    %v814 = vpop.xlane.xlu0 %813
    %v815 = vsel %vm338, %v799, 0.0
    %816 = vadd.xlane.f32.xlu0 %v815
    %v817 = vpop.xlane.xlu0 %816
    %v818 = vsel %vm338, %v800, 0.0
    %819 = vadd.xlane.f32.xlu0 %v818
    %v820 = vpop.xlane.xlu0 %819
    %v821 = vsel %vm338, %v801, 0.0
    %822 = vadd.xlane.f32.xlu0 %v821
    %v823 = vpop.xlane.xlu0 %822
    %v824 = vsel %vm338, %v802, 0.0
    %825 = vadd.xlane.f32.xlu0 %v824
    %v826 = vpop.xlane.xlu0 %825
    %v827 = vmul.f32 %v773, 0.010204081
    %v828 = vmul.f32 %v776, 0.010204081
    %v829 = vmul.f32 %v779, 0.010204081
    %v830 = vmul.f32 %v782, 0.010204081
    %v831 = vmul.f32 %v785, 0.010204081
    %v832 = vmul.f32 %v788, 0.010204081
    %v833 = vmul.f32 %v791, 0.010204081
    %v834 = vmul.f32 %v794, 0.010204081
    %v835 = vmul.f32 %v805, 0.010204081
    %v836 = vmul.f32 %v808, 0.010204081
    %v837 = vmul.f32 %v811, 0.010204081
    %v838 = vmul.f32 %v814, 0.010204081
    %v839 = vmul.f32 %v817, 0.010204081
    %v840 = vmul.f32 %v820, 0.010204081
    %v841 = vmul.f32 %v823, 0.010204081
    %v842 = vmul.f32 %v826, 0.010204081
    %v843 = vmul.f32 %v827, %v827
    %v844 = vmul.f32 %v828, %v828
    %v845 = vmul.f32 %v829, %v829
    %v846 = vmul.f32 %v830, %v830
    %v847 = vmul.f32 %v831, %v831
    %v848 = vmul.f32 %v832, %v832
    %v849 = vmul.f32 %v833, %v833
    %v850 = vmul.f32 %v834, %v834
    %v851 = vsub.f32 %v835, %v843
    %v852 = vsub.f32 %v836, %v844
    %v853 = vsub.f32 %v837, %v845
    %v854 = vsub.f32 %v838, %v846
    %v855 = vsub.f32 %v839, %v847
    %v856 = vsub.f32 %v840, %v848
    %v857 = vsub.f32 %v841, %v849
    %v858 = vsub.f32 %v842, %v850
    %v859 = vld [vmem:[%s11] sm:$0xff]
    %v860 = vld [vmem:[%s11 + $0x8] sm:$0xff]
    %v861 = vld [vmem:[%s11 + $0x10] sm:$0xff]
    %v862 = vld [vmem:[%s11 + $0x18] sm:$0xff]
    %v863 = vld [vmem:[%s11 + $0x20] sm:$0xff]
    %v864 = vld [vmem:[%s11 + $0x28] sm:$0xff]
    %v865 = vld [vmem:[%s11 + $0x30] sm:$0xff]
    %v866 = vld [vmem:[%s11 + $0x38] sm:$0xff]
    %v867 = vadd.f32 %v851, 1e-05
    %v868 = vadd.f32 %v852, 1e-05
    %v869 = vadd.f32 %v853, 1e-05
    %v870 = vadd.f32 %v854, 1e-05
    %v871 = vadd.f32 %v855, 1e-05
    %v872 = vadd.f32 %v856, 1e-05
    %v873 = vadd.f32 %v857, 1e-05
    %v874 = vadd.f32 %v858, 1e-05
    %v875 = vrsqrt.pop %v867
    %v876 = vrsqrt.pop %v868
    %v877 = vrsqrt.pop %v869
    %v878 = vrsqrt.pop %v870
    %v879 = vrsqrt.pop %v871
    %v880 = vrsqrt.pop %v872
    %v881 = vrsqrt.pop %v873
    %v882 = vrsqrt.pop %v874
    %v883 = vmul.f32 %v859, %v875
    %v884 = vmul.f32 %v860, %v876
    %v885 = vmul.f32 %v861, %v877
    %v886 = vmul.f32 %v862, %v878
    %v887 = vmul.f32 %v863, %v879
    %v888 = vmul.f32 %v864, %v880
    %v889 = vmul.f32 %v865, %v881
    %v890 = vmul.f32 %v866, %v882
    %v891 = vld [vmem:[%s12] sm:$0xff]
    %v892 = vld [vmem:[%s12 + $0x8] sm:$0xff]
    %v893 = vld [vmem:[%s12 + $0x10] sm:$0xff]
    %v894 = vld [vmem:[%s12 + $0x18] sm:$0xff]
    %v895 = vld [vmem:[%s12 + $0x20] sm:$0xff]
    %v896 = vld [vmem:[%s12 + $0x28] sm:$0xff]
    %v897 = vld [vmem:[%s12 + $0x30] sm:$0xff]
    %v898 = vld [vmem:[%s12 + $0x38] sm:$0xff]
    %v899 = vmul.f32 %v827, %v883
    %v900 = vmul.f32 %v828, %v884
    %v901 = vmul.f32 %v829, %v885
    %v902 = vmul.f32 %v830, %v886
    %v903 = vmul.f32 %v831, %v887
    %v904 = vmul.f32 %v832, %v888
    %v905 = vmul.f32 %v833, %v889
    %v906 = vmul.f32 %v834, %v890
    %v907 = vsub.f32 %v891, %v899
    %v908 = vsub.f32 %v892, %v900
    %v909 = vsub.f32 %v893, %v901
    %v910 = vsub.f32 %v894, %v902
    %v911 = vsub.f32 %v895, %v903
    %v912 = vsub.f32 %v896, %v904
    %v913 = vsub.f32 %v897, %v905
    %v914 = vsub.f32 %v898, %v906
    %916 = vset.pattern.permute.xlu0 0
    %917 = vperm.xlu0 %916, %v883
    %v918 = vpop.permute.xlu0 %917
    %921 = vset.pattern.permute.xlu0 0
    %922 = vperm.xlu0 %921, %v884
    %v923 = vpop.permute.xlu0 %922
    %926 = vset.pattern.permute.xlu0 0
    %927 = vperm.xlu0 %926, %v885
    %v928 = vpop.permute.xlu0 %927
    %931 = vset.pattern.permute.xlu0 0
    %932 = vperm.xlu0 %931, %v886
    %v933 = vpop.permute.xlu0 %932
    %936 = vset.pattern.permute.xlu0 0
    %937 = vperm.xlu0 %936, %v887
    %v938 = vpop.permute.xlu0 %937
    %941 = vset.pattern.permute.xlu0 0
    %942 = vperm.xlu0 %941, %v888
    %v943 = vpop.permute.xlu0 %942
    %946 = vset.pattern.permute.xlu0 0
    %947 = vperm.xlu0 %946, %v889
    %v948 = vpop.permute.xlu0 %947
    %951 = vset.pattern.permute.xlu0 0
    %952 = vperm.xlu0 %951, %v890
    %v953 = vpop.permute.xlu0 %952
    %v955 = vmul.f32 %v733, %v918
    %v956 = vmul.f32 %v738, %v923
    %v957 = vmul.f32 %v743, %v928
    %v958 = vmul.f32 %v748, %v933
    %v959 = vmul.f32 %v753, %v938
    %v960 = vmul.f32 %v758, %v943
    %v961 = vmul.f32 %v763, %v948
    %v962 = vmul.f32 %v768, %v953
    %964 = vset.pattern.permute.xlu0 0
    %965 = vperm.xlu0 %964, %v907
    %v966 = vpop.permute.xlu0 %965
    %969 = vset.pattern.permute.xlu0 0
    %970 = vperm.xlu0 %969, %v908
    %v971 = vpop.permute.xlu0 %970
    %974 = vset.pattern.permute.xlu0 0
    %975 = vperm.xlu0 %974, %v909
    %v976 = vpop.permute.xlu0 %975
    %979 = vset.pattern.permute.xlu0 0
    %980 = vperm.xlu0 %979, %v910
    %v981 = vpop.permute.xlu0 %980
    %984 = vset.pattern.permute.xlu0 0
    %985 = vperm.xlu0 %984, %v911
    %v986 = vpop.permute.xlu0 %985
    %989 = vset.pattern.permute.xlu0 0
    %990 = vperm.xlu0 %989, %v912
    %v991 = vpop.permute.xlu0 %990
    %994 = vset.pattern.permute.xlu0 0
    %995 = vperm.xlu0 %994, %v913
    %v996 = vpop.permute.xlu0 %995
    %999 = vset.pattern.permute.xlu0 0
    %1000 = vperm.xlu0 %999, %v914
    %v1001 = vpop.permute.xlu0 %1000
    %v1003 = vadd.f32 %v955, %v966
    %v1004 = vadd.f32 %v956, %v971
    %v1005 = vadd.f32 %v957, %v976
    %v1006 = vadd.f32 %v958, %v981
    %v1007 = vadd.f32 %v959, %v986
    %v1008 = vadd.f32 %v960, %v991
    %v1009 = vadd.f32 %v961, %v996
    %v1010 = vadd.f32 %v962, %v1001
    %v1011 = vmul.f32 %v1003, 0.2
    %v1012 = vmul.f32 %v1004, 0.2
    %v1013 = vmul.f32 %v1005, 0.2
    %v1014 = vmul.f32 %v1006, 0.2
    %v1015 = vmul.f32 %v1007, 0.2
    %v1016 = vmul.f32 %v1008, 0.2
    %v1017 = vmul.f32 %v1009, 0.2
    %v1018 = vmul.f32 %v1010, 0.2
    %v1019 = vmax.f32 %v1003, %v1011
    %v1020 = vmax.f32 %v1004, %v1012
    %v1021 = vmax.f32 %v1005, %v1013
    %v1022 = vmax.f32 %v1006, %v1014
    %v1023 = vmax.f32 %v1007, %v1015
    %v1024 = vmax.f32 %v1008, %v1016
    %v1025 = vmax.f32 %v1009, %v1017
    %v1026 = vmax.f32 %v1010, %v1018
    %v1027 = vld [vmem:[%s13] sm:$0xff]
    %v1028 = vld [vmem:[%s13 + $0x8] sm:$0xff]
    %v1029 = vld [vmem:[%s13 + $0x10] sm:$0xff]
    %v1030 = vld [vmem:[%s13 + $0x18] sm:$0xff]
    %v1031 = vld [vmem:[%s13 + $0x20] sm:$0xff]
    %v1032 = vld [vmem:[%s13 + $0x28] sm:$0xff]
    %v1033 = vld [vmem:[%s13 + $0x30] sm:$0xff]
    %v1034 = vld [vmem:[%s13 + $0x38] sm:$0xff]
    %v1035 = vmul.f32 %v1019, %v1027
    %v1036 = vmul.f32 %v1020, %v1028
    %v1037 = vmul.f32 %v1021, %v1029
    %v1038 = vmul.f32 %v1022, %v1030
    %v1039 = vmul.f32 %v1023, %v1031
    %v1040 = vmul.f32 %v1024, %v1032
    %v1041 = vmul.f32 %v1025, %v1033
    %v1042 = vmul.f32 %v1026, %v1034
    %v1043 = vsel %vm338, %v1035, 0.0
    %v1044 = vsel %vm338, %v1036, 0.0
    %v1045 = vadd.f32 %v1043, %v1044
    %v1046 = vsel %vm338, %v1037, 0.0
    %v1047 = vadd.f32 %v1045, %v1046
    %v1048 = vsel %vm338, %v1038, 0.0
    %v1049 = vadd.f32 %v1047, %v1048
    %v1050 = vsel %vm338, %v1039, 0.0
    %v1051 = vadd.f32 %v1049, %v1050
    %v1052 = vsel %vm338, %v1040, 0.0
    %v1053 = vadd.f32 %v1051, %v1052
    %v1054 = vsel %vm338, %v1041, 0.0
    %v1055 = vadd.f32 %v1053, %v1054
    %v1056 = vsel %vm338, %v1042, 0.0
    %v1057 = vadd.f32 %v1055, %v1056
    %v1058 = vrot.slane %v1057, 4
    %v1059 = vadd.f32 %v1057, %v1058
    %v1060 = vrot.slane %v1059, 2
    %v1061 = vadd.f32 %v1059, %v1060
    %v1062 = vrot.slane %v1061, 1
    %v1063 = vadd.f32 %v1061, %v1062
    %v1064 = vld [vmem:[%s14] sm:$0xff]
    %v1065 = vld [vmem:[%s14 + $0x8] sm:$0xff]
    %v1066 = vld [vmem:[%s14 + $0x10] sm:$0xff]
    %v1067 = vld [vmem:[%s14 + $0x18] sm:$0xff]
    %v1068 = vld [vmem:[%s14 + $0x20] sm:$0xff]
    %v1069 = vld [vmem:[%s14 + $0x28] sm:$0xff]
    %v1070 = vld [vmem:[%s14 + $0x30] sm:$0xff]
    %v1071 = vld [vmem:[%s14 + $0x38] sm:$0xff]
    %v1072 = vld [vmem:[%s14 + $0x40] sm:$0xff]
    %v1073 = vld [vmem:[%s14 + $0x48] sm:$0xff]
    %v1074 = vld [vmem:[%s14 + $0x50] sm:$0xff]
    %v1075 = vld [vmem:[%s14 + $0x58] sm:$0xff]
    %v1076 = vld [vmem:[%s14 + $0x60] sm:$0x3]
    %v1078 = vsel %vm338, %v1063, 0
    %vm1080 = vcmask 1041408
    %v1082 = vsel %vm1080, %v1076, 0
    %1084 = vmatprep.subr.mxu0 0.0
    %1085 = vmatpush1.msra.mxu0 0.0
    %1086 = vmatprep.subr.mxu0 0.0
    %1087 = vmatpush1.msra.mxu0 0.0
    %1088 = vmatprep.subr.mxu0 0.0
    %1089 = vmatpush1.msra.mxu0 0.0
    %1090 = vmatprep.subr.mxu0 0.0
    %1091 = vmatpush1.msra.mxu0 %v1082
    %1092 = vmatprep.subr.mxu0 0.0
    %1093 = vmatpush1.msra.mxu0 %v1075
    %1094 = vmatprep.subr.mxu0 0.0
    %1095 = vmatpush1.msra.mxu0 %v1074
    %1096 = vmatprep.subr.mxu0 0.0
    %1097 = vmatpush1.msra.mxu0 %v1073
    %1098 = vmatprep.subr.mxu0 0.0
    %1099 = vmatpush1.msra.mxu0 %v1072
    %1100 = vmatprep.subr.mxu0 0.0
    %1101 = vmatpush1.msra.mxu0 %v1071
    %1102 = vmatprep.subr.mxu0 0.0
    %1103 = vmatpush1.msra.mxu0 %v1070
    %1104 = vmatprep.subr.mxu0 0.0
    %1105 = vmatpush1.msra.mxu0 %v1069
    %1106 = vmatprep.subr.mxu0 0.0
    %1107 = vmatpush1.msra.mxu0 %v1068
    %1108 = vmatprep.subr.mxu0 0.0
    %1109 = vmatpush1.msra.mxu0 %v1067
    %1110 = vmatprep.subr.mxu0 0.0
    %1111 = vmatpush1.msra.mxu0 %v1066
    %1112 = vmatprep.subr.mxu0 0.0
    %1113 = vmatpush1.msra.mxu0 %v1065
    %1114 = vmatprep.subr.mxu0 0.0
    %1115 = vmatpush1.msra.mxu0 %v1064
    %1116 = vmatprep.subr.mxu0 0.0
    %1117 = vmatpush2.msra.mxu0 0.0
    %1118 = vmatprep.subr.mxu0 0.0
    %1119 = vmatpush2.msra.mxu0 0.0
    %1120 = vmatprep.subr.mxu0 0.0
    %1121 = vmatpush2.msra.mxu0 0.0
    %1122 = vmatprep.subr.mxu0 0.0
    %1123 = vmatpush2.msra.mxu0 0.0
    %1124 = vmatprep.subr.mxu0 0.0
    %1125 = vmatpush2.msra.mxu0 0.0
    %1126 = vmatprep.subr.mxu0 0.0
    %1127 = vmatpush2.msra.mxu0 0.0
    %1128 = vmatprep.subr.mxu0 0.0
    %1129 = vmatpush2.msra.mxu0 0.0
    %1130 = vmatprep.subr.mxu0 0.0
    %1131 = vmatpush2.msra.mxu0 0.0
    %1132 = vmatprep.subr.mxu0 0.0
    %1133 = vmatpush2.msra.mxu0 0.0
    %1134 = vmatprep.subr.mxu0 0.0
    %1135 = vmatpush2.msra.mxu0 0.0
    %1136 = vmatprep.subr.mxu0 0.0
    %1137 = vmatpush2.msra.mxu0 0.0
    %1138 = vmatprep.subr.mxu0 0.0
    %1139 = vmatpush2.msra.mxu0 0.0
    %1140 = vmatprep.subr.mxu0 0.0
    %1141 = vmatpush2.msra.mxu0 0.0
    %1142 = vmatprep.subr.mxu0 0.0
    %1143 = vmatpush2.msra.mxu0 0.0
    %1144 = vmatprep.subr.mxu0 0.0
    %1145 = vmatpush2.msra.mxu0 0.0
    %1146 = vmatprep.subr.mxu0 0.0
    %1147 = vmatpush2.msra.mxu0 0.0
    %1148 = vmatprep.mubr.f32.mxu0 0.0
    %1149 = vmatmul.mubr.f32.gmra.mxu0 %v1078
    %v1150 = vpop.f32.mrf.mxu0
    %v1151 = vadd.f32 0.0, %v1150
    %v1152 = vpop.f32.mrf.mxu0
    %1153 = vdwg.mxu0
    %v1154 = vsub.f32 0.0, %v1151
    %v1155 = vmul.f32 %v1154, 1.442695
    %v1156 = vpow.pop %v1155
    %v1157 = vadd.f32 %v1156, 1.0
    %v1158 = vrcp.pop %v1157
    %v1159 = vmul.f32 1.0, %v1158
    %vm1160 = vcmask 8192
    %1161 = vst.msk [vmem:[#allocation2] sm:$0x1] %vm1160, %v1159
    // Predicated region
    $region62: #{discriminator_forward.1} parent=1 // pred_check
      _
    $region63: #{discriminator_forward.1} parent=1 // pred_check_branch
      %1163 = sbr.rel (0) target = $region65
    $region64: #{discriminator_forward.1} parent=1 // pred_region
      %s1165 = ssub.s32 16, 16
      %1166 = vsyncadd [#allocation3], %s1165
      %s1168 = sshll.u32 [#allocation2], 4
      %s1169 = int_to_ptr.vmem [resolvable:$true] %s1168
      %1171 = dma.vmem_to_hbm [thread:$0]  %s1169, 16, %s15, [#allocation3]
    $region65: #{discriminator_forward.1} parent=1 // pred_fallthru
      _
    // Predicated region
    $region66: #{discriminator_forward.1} parent=1 // pred_check
      _
    $region67: #{discriminator_forward.1} parent=1 // pred_check_branch
      %1173 = sbr.rel (0) target = $region69
    $region68: #{discriminator_forward.1} parent=1 // pred_region
      %1174 = dma.done [#allocation3], 16
    $region69: #{discriminator_forward.1} parent=1 // pred_fallthru
      _
    %1175 = vsyncpa [#allocation3], 1

</llo_original>
